<compile_context>
chip_gen: v7x
topology: tpu7x:2x2x1
jax: 0.10.0
libtpu: 0.0.40
codegen_flags: <defaults>
</compile_context>

<pallas_src>
import functools

import jax
import jax.numpy as jnp
import numpy as np
from jax.experimental import pallas as pl
from jax.experimental.pallas import tpu as pltpu

DROPOUT_P = 0.1


# ----------------------------------------------------------------------------- dropout
def _dropout_kernel(z_ref, bits_ref, o_ref, *, threshold, scale):
    # keep iff uniform uint32 >= p * 2^32  (keep prob = 1 - p), inverted scaling.
    keep = bits_ref[...] >= jnp.uint32(threshold)
    o_ref[...] = jnp.where(keep, z_ref[...] * scale, 0.0).astype(o_ref.dtype)


def dropout_pallas(z, key, p=DROPOUT_P, *, tm=256, out_dtype=jnp.bfloat16):
    """Inverted dropout, applied once so the same mask feeds both sides of z @ z.T."""
    N, D = z.shape
    tm = min(tm, N)
    assert N % tm == 0, "N must be a multiple of the row tile"
    # Random bits drawn host-side (threefry) -> portable; kernel just thresholds.
    bits = jax.random.bits(key, (N, D), dtype=jnp.uint32)
    threshold = min(int(round(p * (2.0 ** 32))), 2 ** 32 - 1)
    scale = 1.0 / (1.0 - p)
    return pl.pallas_call(
        functools.partial(_dropout_kernel, threshold=threshold, scale=scale),
        out_shape=jax.ShapeDtypeStruct((N, D), out_dtype),
        grid_spec=pltpu.PrefetchScalarGridSpec(
            num_scalar_prefetch=0,
            grid=(N // tm,),
            in_specs=[pl.BlockSpec((tm, D), lambda i: (i, 0)),
                      pl.BlockSpec((tm, D), lambda i: (i, 0))],
            out_specs=pl.BlockSpec((tm, D), lambda i: (i, 0)),
        ),
        compiler_params=pltpu.CompilerParams(
            dimension_semantics=("parallel",)),   # row tiles independent -> megacore ok
    )(z, bits)


# ------------------------------------------------------------------ z @ z.T + sigmoid
def _sigmoid(x):
    # plain VPU/EUP formulation (avoids any custom-jvp lowering surprises in-kernel)
    return 1.0 / (1.0 + jnp.exp(-x))


def _ip_sigmoid_kernel(a_ref, b_ref, o_ref):
    # a_ref: (tm, D) rows i of zd ; b_ref: (tn, D) rows j of zd.
    # Contract on the last dim of BOTH operands -> no transpose materialized.
    s = jax.lax.dot_general(
        a_ref[...], b_ref[...],
        dimension_numbers=(((1,), (1,)), ((), ())),
        preferred_element_type=jnp.float32)
    o_ref[...] = _sigmoid(s).astype(o_ref.dtype)


def _ip_sigmoid_acc_kernel(a_ref, b_ref, o_ref, acc_ref):
    # Fallback for large D: tiled k-reduction with an f32 VMEM accumulator.
    @pl.when(pl.program_id(2) == 0)
    def _():
        acc_ref[...] = jnp.zeros_like(acc_ref)

    acc_ref[...] += jax.lax.dot_general(
        a_ref[...], b_ref[...],
        dimension_numbers=(((1,), (1,)), ((), ())),
        preferred_element_type=jnp.float32)

    @pl.when(pl.program_id(2) == pl.num_programs(2) - 1)
    def _():
        o_ref[...] = _sigmoid(acc_ref[...]).astype(o_ref.dtype)


def inner_product_decoder_matmul(zd, *, tm=256, tn=256, max_tk=512):
    N, D = zd.shape
    tm = min(tm, N)
    tn = min(tn, N)
    assert N % tm == 0 and N % tn == 0, "N must be a multiple of the output tiles"
    itemsize = jnp.dtype(zd.dtype).itemsize
    cost = pl.CostEstimate(
        flops=2 * N * N * D,
        transcendentals=N * N,
        bytes_accessed=2 * N * D * itemsize + N * N * 4,
    )

    if D <= max_tk:
        # Degenerate k axis: single-shot matmul + fused sigmoid, no accumulator.
        return pl.pallas_call(
            _ip_sigmoid_kernel,
            out_shape=jax.ShapeDtypeStruct((N, N), jnp.float32),
            grid_spec=pltpu.PrefetchScalarGridSpec(
                num_scalar_prefetch=0,
                grid=(N // tm, N // tn),
                in_specs=[pl.BlockSpec((tm, D), lambda i, j: (i, 0)),
                          pl.BlockSpec((tn, D), lambda i, j: (j, 0))],
                out_specs=pl.BlockSpec((tm, tn), lambda i, j: (i, j)),
            ),
            compiler_params=pltpu.CompilerParams(
                dimension_semantics=("parallel", "parallel")),
            cost_estimate=cost,
        )(zd, zd)

    # Large-D fallback: accumulate over k tiles.
    tk = max_tk
    assert D % tk == 0, "D must be a multiple of the k tile"
    return pl.pallas_call(
        _ip_sigmoid_acc_kernel,
        out_shape=jax.ShapeDtypeStruct((N, N), jnp.float32),
        grid_spec=pltpu.PrefetchScalarGridSpec(
            num_scalar_prefetch=0,
            grid=(N // tm, N // tn, D // tk),
            in_specs=[pl.BlockSpec((tm, tk), lambda i, j, k: (i, k)),
                      pl.BlockSpec((tn, tk), lambda i, j, k: (j, k))],
            out_specs=pl.BlockSpec((tm, tn), lambda i, j, k: (i, j)),
            scratch_shapes=[pltpu.VMEM((tm, tn), jnp.float32)],
        ),
        compiler_params=pltpu.CompilerParams(
            dimension_semantics=("parallel", "parallel", "arbitrary")),
        cost_estimate=cost,
    )(zd, zd)


def inner_product_decoder(z, key, p=DROPOUT_P, training=True):
    """Full forward: sigmoid(dropout(z, p) @ dropout(z, p).T), same dropout mask."""
    if training and p > 0.0:
        zd = dropout_pallas(z, key, p)
    else:
        zd = z.astype(jnp.bfloat16)   # eval mode: no dropout (matches F.dropout eval)
    adj = inner_product_decoder_matmul(zd)
    return adj, zd


# ---------------------------------------------------------------------------- main
if __name__ == "__main__":
    # module has no learnable parameters; only inputs are needed.
    N, D = 256, 128
    key = jax.random.PRNGKey(0)
    zkey, dkey = jax.random.split(key)
    z = jax.random.normal(zkey, (N, D), dtype=jnp.float32)

    adj, zd = inner_product_decoder(z, dkey, p=DROPOUT_P)
    adj = jax.block_until_ready(adj)
    zd = jax.block_until_ready(zd)

    # Check the matmul+sigmoid kernel against plain numpy using the same
    # (kernel-produced, bf16) dropped matrix.
    zd32 = np.asarray(zd, dtype=np.float32)
    ref = 1.0 / (1.0 + np.exp(-(zd32 @ zd32.T)))
    np.testing.assert_allclose(np.asarray(adj), ref, atol=1e-3, rtol=1e-3)

    assert adj.shape == (N, N) and adj.dtype == jnp.float32
    print("KERNEL_OK")
</pallas_src>

<mosaic_0001>
module attributes {stable_mosaic.version = 11 : i64} {
  func.func @_dropout_kernel(%arg0: i32, %arg1: memref<256x128xf32, #tpu.memory_space<vmem>>, %arg2: memref<256x128xi32, #tpu.memory_space<vmem>>, %arg3: memref<256x128xbf16, #tpu.memory_space<vmem>>) attributes {dimension_semantics = [#tpu.dimension_semantics<parallel>], iteration_bounds = array<i64: 1>, scalar_prefetch = 0 : i64, scratch_operands = 0 : i64, tpu.core_type = #tpu.core_type<tc>, window_params = [{transform_indices = @transform_0, window_bounds = array<i64: 256, 128>}, {transform_indices = @transform_1, window_bounds = array<i64: 256, 128>}, {transform_indices = @transform_2, window_bounds = array<i64: 256, 128>}]} {
    %c0 = arith.constant 0 : index
    %c0_0 = arith.constant 0 : index
    %0 = vector.load %arg2[%c0, %c0_0] : memref<256x128xi32, #tpu.memory_space<vmem>>, vector<256x128xi32>
    %c429496730_i32 = arith.constant 429496730 : i32
    %1 = vector.broadcast %c429496730_i32 : i32 to vector<256x128xi32>
    %2 = arith.cmpi uge, %0, %1 : vector<256x128xi32>
    %c0_1 = arith.constant 0 : index
    %c0_2 = arith.constant 0 : index
    %3 = vector.load %arg1[%c0_1, %c0_2] : memref<256x128xf32, #tpu.memory_space<vmem>>, vector<256x128xf32>
    %cst = arith.constant 1.11111116 : f32
    %4 = vector.broadcast %cst : f32 to vector<256x128xf32>
    %5 = arith.mulf %3, %4 : vector<256x128xf32>
    %cst_3 = arith.constant 0.000000e+00 : f32
    %6 = vector.broadcast %cst_3 : f32 to vector<256x128xf32>
    %7 = arith.select %2, %5, %6 : vector<256x128xi1>, vector<256x128xf32>
    %8 = arith.truncf %7 : vector<256x128xf32> to vector<256x128xbf16>
    %c0_4 = arith.constant 0 : index
    %c0_5 = arith.constant 0 : index
    %9 = vector.load %arg3[%c0_4, %c0_5] : memref<256x128xbf16, #tpu.memory_space<vmem>>, vector<256x128xbf16>
    tpu.vector_store %arg3[%c0_4, %c0_5], %8 {strides = array<i32>} : memref<256x128xbf16, #tpu.memory_space<vmem>>, vector<256x128xbf16>,
    return
  }
  func.func @transform_0(%arg0: i32) -> (i32, i32) {
    %c0_i32 = arith.constant 0 : i32
    %c0_i32_0 = arith.constant 0 : i32
    return %arg0, %c0_i32 : i32, i32
  }
  func.func @transform_1(%arg0: i32) -> (i32, i32) {
    %c0_i32 = arith.constant 0 : i32
    %c0_i32_0 = arith.constant 0 : i32
    return %arg0, %c0_i32 : i32, i32
  }
  func.func @transform_2(%arg0: i32) -> (i32, i32) {
    %c0_i32 = arith.constant 0 : i32
    %c0_i32_0 = arith.constant 0 : i32
    return %arg0, %c0_i32 : i32, i32
  }
}

</mosaic_0001>

<llo_original>
// kernel: tpu_custom_call.1
$region0: #{tpu_custom_call.1}
  #allocation0 [shape = 'u32[]', space=smem, size = 0x4, offset = 0x4, fixed_abs, tag = 'smem constant byte address 0x4 - core index']
  #allocation1 [shape = 'u32[144,128]{1,0:T(1,128)}', space=vmem, size = 0x12000, scoped, tag = 'internal scratch']
  %s0 = inlined_call_operand.hbm [shape: f32[256,128], index: 0, kind: input, shape index: {}]
  %s1 = inlined_call_operand.hbm [shape: u32[256,128], index: 1, kind: input, shape index: {}]
  %s2 = inlined_call_operand.hbm [shape: bf16[256,128], index: 2, kind: output, shape index: {}]
  %s3 = sld [smem:[#allocation0]]
  $region26: #{tpu_custom_call.1} parent=0
    _
  %s5 = ssub.s32 1, %s3
  %s6 = scalar_select 0, %s5, %s3
  $region1: #{tpu_custom_call.1} parent=0
    #allocation2 [shape = 'u8[131072]{0}', space=vmem, size = 0x20000, scoped, tag = 'input window, operand 0, single buffered']
    #allocation3 [shape = 's32[1]{0}', space=sflag, size = 0x4, scoped, tag = 'scoped memory for tpu_custom_call.1']
    #allocation4 [shape = 's32[1]{0}', space=sflag, size = 0x4, scoped, tag = 'scoped memory for tpu_custom_call.1']
    #allocation5 [shape = 'u8[131072]{0}', space=vmem, size = 0x20000, scoped, tag = 'input window, operand 1, single buffered']
    #allocation6 [shape = 's32[1]{0}', space=sflag, size = 0x4, scoped, tag = 'scoped memory for tpu_custom_call.1']
    #allocation7 [shape = 'u8[65536]{0}', space=vmem, size = 0x10000, scoped, tag = 'output window, operand 0, single buffered']
    %7 = vsyncpa [#allocation3], 0
    %8 = vsyncpa [#allocation6], 0
    %9 = vsyncpa [#allocation4], 0
    // Predicated region
    $region2: #{tpu_custom_call.1} parent=1 // pred_check
      _
    $region3: #{tpu_custom_call.1} parent=1 // pred_check_branch
      %11 = sbr.rel (0) target = $region5
    $region4: #{tpu_custom_call.1} parent=1 // pred_region
      %s13 = ssub.s32 4096, 4096
      %14 = vsyncadd [#allocation3], %s13
      %s15 = sshll.u32 [#allocation2], 4
      %s16 = int_to_ptr.vmem [resolvable:$true] %s15
      %21 = dma.hbm_to_vmem [thread:$0]  %s0, 4096, %s16, [#allocation3], 128, 128, 8
    $region5: #{tpu_custom_call.1} parent=1 // pred_fallthru
      _
    // Predicated region
    $region6: #{tpu_custom_call.1} parent=1 // pred_check
      _
    $region7: #{tpu_custom_call.1} parent=1 // pred_check_branch
      %23 = sbr.rel (0) target = $region9
    $region8: #{tpu_custom_call.1} parent=1 // pred_region
      %s25 = ssub.s32 4096, 4096
      %26 = vsyncadd [#allocation6], %s25
      %s27 = sshll.u32 [#allocation5], 4
      %s28 = int_to_ptr.vmem [resolvable:$true] %s27
      %33 = dma.hbm_to_vmem [thread:$0]  %s1, 4096, %s28, [#allocation6], 128, 128, 8
    $region9: #{tpu_custom_call.1} parent=1 // pred_fallthru
      _
    // Predicated region
    $region10: #{tpu_custom_call.1} parent=1 // pred_check
      _
    $region11: #{tpu_custom_call.1} parent=1 // pred_check_branch
      %35 = sbr.rel (0) target = $region13
    $region12: #{tpu_custom_call.1} parent=1 // pred_region
      %36 = dma.done [#allocation3], 4096
    $region13: #{tpu_custom_call.1} parent=1 // pred_fallthru
      _
    // Predicated region
    $region14: #{tpu_custom_call.1} parent=1 // pred_check
      _
    $region15: #{tpu_custom_call.1} parent=1 // pred_check_branch
      %38 = sbr.rel (0) target = $region17
    $region16: #{tpu_custom_call.1} parent=1 // pred_region
      %39 = dma.done [#allocation6], 4096
    $region17: #{tpu_custom_call.1} parent=1 // pred_fallthru
      _
    %v40 = vld [vmem:[#allocation5] sm:$0xff]
    %v41 = vld [vmem:[#allocation5 + $0x8] sm:$0xff]
    %v42 = vld [vmem:[#allocation5 + $0x10] sm:$0xff]
    %v43 = vld [vmem:[#allocation5 + $0x18] sm:$0xff]
    %v44 = vld [vmem:[#allocation5 + $0x20] sm:$0xff]
    %v45 = vld [vmem:[#allocation5 + $0x28] sm:$0xff]
    %v46 = vld [vmem:[#allocation5 + $0x30] sm:$0xff]
    %v47 = vld [vmem:[#allocation5 + $0x38] sm:$0xff]
    %v48 = vld [vmem:[#allocation5 + $0x40] sm:$0xff]
    %v49 = vld [vmem:[#allocation5 + $0x48] sm:$0xff]
    %v50 = vld [vmem:[#allocation5 + $0x50] sm:$0xff]
    %v51 = vld [vmem:[#allocation5 + $0x58] sm:$0xff]
    %v52 = vld [vmem:[#allocation5 + $0x60] sm:$0xff]
    %v53 = vld [vmem:[#allocation5 + $0x68] sm:$0xff]
    %v54 = vld [vmem:[#allocation5 + $0x70] sm:$0xff]
    %v55 = vld [vmem:[#allocation5 + $0x78] sm:$0xff]
    %v56 = vld [vmem:[#allocation5 + $0x80] sm:$0xff]
    %v57 = vld [vmem:[#allocation5 + $0x88] sm:$0xff]
    %v58 = vld [vmem:[#allocation5 + $0x90] sm:$0xff]
    %v59 = vld [vmem:[#allocation5 + $0x98] sm:$0xff]
    %v60 = vld [vmem:[#allocation5 + $0xa0] sm:$0xff]
    %v61 = vld [vmem:[#allocation5 + $0xa8] sm:$0xff]
    %v62 = vld [vmem:[#allocation5 + $0xb0] sm:$0xff]
    %v63 = vld [vmem:[#allocation5 + $0xb8] sm:$0xff]
    %v64 = vld [vmem:[#allocation5 + $0xc0] sm:$0xff]
    %v65 = vld [vmem:[#allocation5 + $0xc8] sm:$0xff]
    %v66 = vld [vmem:[#allocation5 + $0xd0] sm:$0xff]
    %v67 = vld [vmem:[#allocation5 + $0xd8] sm:$0xff]
    %v68 = vld [vmem:[#allocation5 + $0xe0] sm:$0xff]
    %v69 = vld [vmem:[#allocation5 + $0xe8] sm:$0xff]
    %v70 = vld [vmem:[#allocation5 + $0xf0] sm:$0xff]
    %v71 = vld [vmem:[#allocation5 + $0xf8] sm:$0xff]
    %vm72 = vcmp.ge.u32.totalorder %v40, 429496730
    %vm73 = vcmp.ge.u32.totalorder %v41, 429496730
    %vm74 = vcmp.ge.u32.totalorder %v42, 429496730
    %vm75 = vcmp.ge.u32.totalorder %v43, 429496730
    %vm76 = vcmp.ge.u32.totalorder %v44, 429496730
    %vm77 = vcmp.ge.u32.totalorder %v45, 429496730
    %vm78 = vcmp.ge.u32.totalorder %v46, 429496730
    %vm79 = vcmp.ge.u32.totalorder %v47, 429496730
    %vm80 = vcmp.ge.u32.totalorder %v48, 429496730
    %vm81 = vcmp.ge.u32.totalorder %v49, 429496730
    %vm82 = vcmp.ge.u32.totalorder %v50, 429496730
    %vm83 = vcmp.ge.u32.totalorder %v51, 429496730
    %vm84 = vcmp.ge.u32.totalorder %v52, 429496730
    %vm85 = vcmp.ge.u32.totalorder %v53, 429496730
    %vm86 = vcmp.ge.u32.totalorder %v54, 429496730
    %vm87 = vcmp.ge.u32.totalorder %v55, 429496730
    %vm88 = vcmp.ge.u32.totalorder %v56, 429496730
    %vm89 = vcmp.ge.u32.totalorder %v57, 429496730
    %vm90 = vcmp.ge.u32.totalorder %v58, 429496730
    %vm91 = vcmp.ge.u32.totalorder %v59, 429496730
    %vm92 = vcmp.ge.u32.totalorder %v60, 429496730
    %vm93 = vcmp.ge.u32.totalorder %v61, 429496730
    %vm94 = vcmp.ge.u32.totalorder %v62, 429496730
    %vm95 = vcmp.ge.u32.totalorder %v63, 429496730
    %vm96 = vcmp.ge.u32.totalorder %v64, 429496730
    %vm97 = vcmp.ge.u32.totalorder %v65, 429496730
    %vm98 = vcmp.ge.u32.totalorder %v66, 429496730
    %vm99 = vcmp.ge.u32.totalorder %v67, 429496730
    %vm100 = vcmp.ge.u32.totalorder %v68, 429496730
    %vm101 = vcmp.ge.u32.totalorder %v69, 429496730
    %vm102 = vcmp.ge.u32.totalorder %v70, 429496730
    %vm103 = vcmp.ge.u32.totalorder %v71, 429496730
    %v104 = vld [vmem:[#allocation2] sm:$0xff]
    %v105 = vld [vmem:[#allocation2 + $0x8] sm:$0xff]
    %v106 = vld [vmem:[#allocation2 + $0x10] sm:$0xff]
    %v107 = vld [vmem:[#allocation2 + $0x18] sm:$0xff]
    %v108 = vld [vmem:[#allocation2 + $0x20] sm:$0xff]
    %v109 = vld [vmem:[#allocation2 + $0x28] sm:$0xff]
    %v110 = vld [vmem:[#allocation2 + $0x30] sm:$0xff]
    %v111 = vld [vmem:[#allocation2 + $0x38] sm:$0xff]
    %v112 = vld [vmem:[#allocation2 + $0x40] sm:$0xff]
    %v113 = vld [vmem:[#allocation2 + $0x48] sm:$0xff]
    %v114 = vld [vmem:[#allocation2 + $0x50] sm:$0xff]
    %v115 = vld [vmem:[#allocation2 + $0x58] sm:$0xff]
    %v116 = vld [vmem:[#allocation2 + $0x60] sm:$0xff]
    %v117 = vld [vmem:[#allocation2 + $0x68] sm:$0xff]
    %v118 = vld [vmem:[#allocation2 + $0x70] sm:$0xff]
    %v119 = vld [vmem:[#allocation2 + $0x78] sm:$0xff]
    %v120 = vld [vmem:[#allocation2 + $0x80] sm:$0xff]
    %v121 = vld [vmem:[#allocation2 + $0x88] sm:$0xff]
    %v122 = vld [vmem:[#allocation2 + $0x90] sm:$0xff]
    %v123 = vld [vmem:[#allocation2 + $0x98] sm:$0xff]
    %v124 = vld [vmem:[#allocation2 + $0xa0] sm:$0xff]
    %v125 = vld [vmem:[#allocation2 + $0xa8] sm:$0xff]
    %v126 = vld [vmem:[#allocation2 + $0xb0] sm:$0xff]
    %v127 = vld [vmem:[#allocation2 + $0xb8] sm:$0xff]
    %v128 = vld [vmem:[#allocation2 + $0xc0] sm:$0xff]
    %v129 = vld [vmem:[#allocation2 + $0xc8] sm:$0xff]
    %v130 = vld [vmem:[#allocation2 + $0xd0] sm:$0xff]
    %v131 = vld [vmem:[#allocation2 + $0xd8] sm:$0xff]
    %v132 = vld [vmem:[#allocation2 + $0xe0] sm:$0xff]
    %v133 = vld [vmem:[#allocation2 + $0xe8] sm:$0xff]
    %v134 = vld [vmem:[#allocation2 + $0xf0] sm:$0xff]
    %v135 = vld [vmem:[#allocation2 + $0xf8] sm:$0xff]
    %v136 = vmul.f32 %v104, 1.1111112
    %v137 = vmul.f32 %v105, 1.1111112
    %v138 = vmul.f32 %v106, 1.1111112
    %v139 = vmul.f32 %v107, 1.1111112
    %v140 = vmul.f32 %v108, 1.1111112
    %v141 = vmul.f32 %v109, 1.1111112
    %v142 = vmul.f32 %v110, 1.1111112
    %v143 = vmul.f32 %v111, 1.1111112
    %v144 = vmul.f32 %v112, 1.1111112
    %v145 = vmul.f32 %v113, 1.1111112
    %v146 = vmul.f32 %v114, 1.1111112
    %v147 = vmul.f32 %v115, 1.1111112
    %v148 = vmul.f32 %v116, 1.1111112
    %v149 = vmul.f32 %v117, 1.1111112
    %v150 = vmul.f32 %v118, 1.1111112
    %v151 = vmul.f32 %v119, 1.1111112
    %v152 = vmul.f32 %v120, 1.1111112
    %v153 = vmul.f32 %v121, 1.1111112
    %v154 = vmul.f32 %v122, 1.1111112
    %v155 = vmul.f32 %v123, 1.1111112
    %v156 = vmul.f32 %v124, 1.1111112
    %v157 = vmul.f32 %v125, 1.1111112
    %v158 = vmul.f32 %v126, 1.1111112
    %v159 = vmul.f32 %v127, 1.1111112
    %v160 = vmul.f32 %v128, 1.1111112
    %v161 = vmul.f32 %v129, 1.1111112
    %v162 = vmul.f32 %v130, 1.1111112
    %v163 = vmul.f32 %v131, 1.1111112
    %v164 = vmul.f32 %v132, 1.1111112
    %v165 = vmul.f32 %v133, 1.1111112
    %v166 = vmul.f32 %v134, 1.1111112
    %v167 = vmul.f32 %v135, 1.1111112
    %v168 = vsel %vm72, %v136, 0.0
    %v169 = vsel %vm73, %v137, 0.0
    %v170 = vsel %vm74, %v138, 0.0
    %v171 = vsel %vm75, %v139, 0.0
    %v172 = vsel %vm76, %v140, 0.0
    %v173 = vsel %vm77, %v141, 0.0
    %v174 = vsel %vm78, %v142, 0.0
    %v175 = vsel %vm79, %v143, 0.0
    %v176 = vsel %vm80, %v144, 0.0
    %v177 = vsel %vm81, %v145, 0.0
    %v178 = vsel %vm82, %v146, 0.0
    %v179 = vsel %vm83, %v147, 0.0
    %v180 = vsel %vm84, %v148, 0.0
    %v181 = vsel %vm85, %v149, 0.0
    %v182 = vsel %vm86, %v150, 0.0
    %v183 = vsel %vm87, %v151, 0.0
    %v184 = vsel %vm88, %v152, 0.0
    %v185 = vsel %vm89, %v153, 0.0
    %v186 = vsel %vm90, %v154, 0.0
    %v187 = vsel %vm91, %v155, 0.0
    %v188 = vsel %vm92, %v156, 0.0
    %v189 = vsel %vm93, %v157, 0.0
    %v190 = vsel %vm94, %v158, 0.0
    %v191 = vsel %vm95, %v159, 0.0
    %v192 = vsel %vm96, %v160, 0.0
    %v193 = vsel %vm97, %v161, 0.0
    %v194 = vsel %vm98, %v162, 0.0
    %v195 = vsel %vm99, %v163, 0.0
    %v196 = vsel %vm100, %v164, 0.0
    %v197 = vsel %vm101, %v165, 0.0
    %v198 = vsel %vm102, %v166, 0.0
    %v199 = vsel %vm103, %v167, 0.0
    %v200 = vpack.c.bf16 %v169, %v168
    %v201 = vpack.c.bf16 %v171, %v170
    %v202 = vpack.c.bf16 %v173, %v172
    %v203 = vpack.c.bf16 %v175, %v174
    %v204 = vpack.c.bf16 %v177, %v176
    %v205 = vpack.c.bf16 %v179, %v178
    %v206 = vpack.c.bf16 %v181, %v180
    %v207 = vpack.c.bf16 %v183, %v182
    %v208 = vpack.c.bf16 %v185, %v184
    %v209 = vpack.c.bf16 %v187, %v186
    %v210 = vpack.c.bf16 %v189, %v188
    %v211 = vpack.c.bf16 %v191, %v190
    %v212 = vpack.c.bf16 %v193, %v192
    %v213 = vpack.c.bf16 %v195, %v194
    %v214 = vpack.c.bf16 %v197, %v196
    %v215 = vpack.c.bf16 %v199, %v198
    %v232 = vunpack.c.l.b16 %v200
    %v233 = vunpack.c.h.b16 %v200
    %v234 = vunpack.c.l.b16 %v201
    %v235 = vunpack.c.h.b16 %v201
    %v236 = vunpack.c.l.b16 %v202
    %v237 = vunpack.c.h.b16 %v202
    %v238 = vunpack.c.l.b16 %v203
    %v239 = vunpack.c.h.b16 %v203
    %v240 = vunpack.c.l.b16 %v204
    %v241 = vunpack.c.h.b16 %v204
    %v242 = vunpack.c.l.b16 %v205
    %v243 = vunpack.c.h.b16 %v205
    %v244 = vunpack.c.l.b16 %v206
    %v245 = vunpack.c.h.b16 %v206
    %v246 = vunpack.c.l.b16 %v207
    %v247 = vunpack.c.h.b16 %v207
    %v248 = vunpack.c.l.b16 %v208
    %v249 = vunpack.c.h.b16 %v208
    %v250 = vunpack.c.l.b16 %v209
    %v251 = vunpack.c.h.b16 %v209
    %v252 = vunpack.c.l.b16 %v210
    %v253 = vunpack.c.h.b16 %v210
    %v254 = vunpack.c.l.b16 %v211
    %v255 = vunpack.c.h.b16 %v211
    %v256 = vunpack.c.l.b16 %v212
    %v257 = vunpack.c.h.b16 %v212
    %v258 = vunpack.c.l.b16 %v213
    %v259 = vunpack.c.h.b16 %v213
    %v260 = vunpack.c.l.b16 %v214
    %v261 = vunpack.c.h.b16 %v214
    %v262 = vunpack.c.l.b16 %v215
    %v263 = vunpack.c.h.b16 %v215
    %v264 = vpack.c.b16 %v232, %v232
    %v265 = vpack.c.b16 %v233, %v233
    %v266 = vpack.c.b16 %v234, %v234
    %v267 = vpack.c.b16 %v235, %v235
    %v268 = vpack.c.b16 %v236, %v236
    %v269 = vpack.c.b16 %v237, %v237
    %v270 = vpack.c.b16 %v238, %v238
    %v271 = vpack.c.b16 %v239, %v239
    %v272 = vpack.c.b16 %v240, %v240
    %v273 = vpack.c.b16 %v241, %v241
    %v274 = vpack.c.b16 %v242, %v242
    %v275 = vpack.c.b16 %v243, %v243
    %v276 = vpack.c.b16 %v244, %v244
    %v277 = vpack.c.b16 %v245, %v245
    %v278 = vpack.c.b16 %v246, %v246
    %v279 = vpack.c.b16 %v247, %v247
    %v280 = vpack.c.b16 %v248, %v248
    %v281 = vpack.c.b16 %v249, %v249
    %v282 = vpack.c.b16 %v250, %v250
    %v283 = vpack.c.b16 %v251, %v251
    %v284 = vpack.c.b16 %v252, %v252
    %v285 = vpack.c.b16 %v253, %v253
    %v286 = vpack.c.b16 %v254, %v254
    %v287 = vpack.c.b16 %v255, %v255
    %v288 = vpack.c.b16 %v256, %v256
    %v289 = vpack.c.b16 %v257, %v257
    %v290 = vpack.c.b16 %v258, %v258
    %v291 = vpack.c.b16 %v259, %v259
    %v292 = vpack.c.b16 %v260, %v260
    %v293 = vpack.c.b16 %v261, %v261
    %v294 = vpack.c.b16 %v262, %v262
    %v295 = vpack.c.b16 %v263, %v263
    %328 = vst [vmem:[#allocation7] sm:$0xf] %v264
    %329 = vst [vmem:[#allocation7 + $0x4] sm:$0xf] %v265
    %330 = vst [vmem:[#allocation7 + $0x8] sm:$0xf] %v266
    %331 = vst [vmem:[#allocation7 + $0xc] sm:$0xf] %v267
    %332 = vst [vmem:[#allocation7 + $0x10] sm:$0xf] %v268
    %333 = vst [vmem:[#allocation7 + $0x14] sm:$0xf] %v269
    %334 = vst [vmem:[#allocation7 + $0x18] sm:$0xf] %v270
    %335 = vst [vmem:[#allocation7 + $0x1c] sm:$0xf] %v271
    %336 = vst [vmem:[#allocation7 + $0x20] sm:$0xf] %v272
    %337 = vst [vmem:[#allocation7 + $0x24] sm:$0xf] %v273
    %338 = vst [vmem:[#allocation7 + $0x28] sm:$0xf] %v274
    %339 = vst [vmem:[#allocation7 + $0x2c] sm:$0xf] %v275
    %340 = vst [vmem:[#allocation7 + $0x30] sm:$0xf] %v276
    %341 = vst [vmem:[#allocation7 + $0x34] sm:$0xf] %v277
    %342 = vst [vmem:[#allocation7 + $0x38] sm:$0xf] %v278
    %343 = vst [vmem:[#allocation7 + $0x3c] sm:$0xf] %v279
    %344 = vst [vmem:[#allocation7 + $0x40] sm:$0xf] %v280
    %345 = vst [vmem:[#allocation7 + $0x44] sm:$0xf] %v281
    %346 = vst [vmem:[#allocation7 + $0x48] sm:$0xf] %v282
    %347 = vst [vmem:[#allocation7 + $0x4c] sm:$0xf] %v283
    %348 = vst [vmem:[#allocation7 + $0x50] sm:$0xf] %v284
    %349 = vst [vmem:[#allocation7 + $0x54] sm:$0xf] %v285
    %350 = vst [vmem:[#allocation7 + $0x58] sm:$0xf] %v286
    %351 = vst [vmem:[#allocation7 + $0x5c] sm:$0xf] %v287
    %352 = vst [vmem:[#allocation7 + $0x60] sm:$0xf] %v288
    %353 = vst [vmem:[#allocation7 + $0x64] sm:$0xf] %v289
    %354 = vst [vmem:[#allocation7 + $0x68] sm:$0xf] %v290
    %355 = vst [vmem:[#allocation7 + $0x6c] sm:$0xf] %v291
    %356 = vst [vmem:[#allocation7 + $0x70] sm:$0xf] %v292
    %357 = vst [vmem:[#allocation7 + $0x74] sm:$0xf] %v293
    %358 = vst [vmem:[#allocation7 + $0x78] sm:$0xf] %v294
    %359 = vst [vmem:[#allocation7 + $0x7c] sm:$0xf] %v295
    // Predicated region
    $region18: #{tpu_custom_call.1} parent=1 // pred_check
      _
    $region19: #{tpu_custom_call.1} parent=1 // pred_check_branch
      %361 = sbr.rel (0) target = $region21
    $region20: #{tpu_custom_call.1} parent=1 // pred_region
      %s363 = ssub.s32 2048, 2048
      %364 = vsyncadd [#allocation4], %s363
      %s365 = sshll.u32 [#allocation7], 4
      %s366 = int_to_ptr.vmem [resolvable:$true] %s365
      %371 = dma.vmem_to_hbm [thread:$0]  %s366, 2048, %s2, [#allocation4], 64, 64, 4
    $region21: #{tpu_custom_call.1} parent=1 // pred_fallthru
      _
    // Predicated region
    $region22: #{tpu_custom_call.1} parent=1 // pred_check
      _
    $region23: #{tpu_custom_call.1} parent=1 // pred_check_branch
      %373 = sbr.rel (0) target = $region25
    $region24: #{tpu_custom_call.1} parent=1 // pred_region
      %374 = dma.done [#allocation4], 2048
    $region25: #{tpu_custom_call.1} parent=1 // pred_fallthru
      _
    %375 = vsyncpa [#allocation3], 1
    %376 = vsyncpa [#allocation6], 1
    %377 = vsyncpa [#allocation4], 1

</llo_original>
